<compile_context>
chip_gen: v6e
topology: v6e:2x2x1
jax: 0.10.0
libtpu: 0.0.40
codegen_flags: <defaults>
</compile_context>

<pallas_src>
import jax
import jax.numpy as jnp
from jax.experimental import pallas as pl
from jax.experimental.pallas import tpu as pltpu


def _bottleneck_kernel(x_ref, s1_ref, b1_ref, w1_ref, s2_ref, b2_ref, w2_ref,
                       o_ref):
    """x:(Bb,Cin,L)  s*/b*:(C,1)  w1:(Cmid,Cin)  w2:(3,G,Cmid)  o:(Bb,G+Cin,L)."""
    f32 = jnp.float32
    s1 = s1_ref[...].astype(f32)          # (Cin, 1)   folded bn1 scale
    b1 = b1_ref[...].astype(f32)          # (Cin, 1)   folded bn1 bias
    w1 = w1_ref[...].astype(f32)          # (Cmid, Cin) conv1 (1x1) weight
    s2 = s2_ref[...].astype(f32)          # (Cmid, 1)  folded bn2 scale
    b2 = b2_ref[...].astype(f32)          # (Cmid, 1)  folded bn2 bias
    w2_m1 = w2_ref[0].astype(f32)         # (G, Cmid)  conv2 tap seeing h2[l-1]
    w2_c = w2_ref[1].astype(f32)          # (G, Cmid)  conv2 tap seeing h2[l]
    w2_p1 = w2_ref[2].astype(f32)         # (G, Cmid)  conv2 tap seeing h2[l+1]

    bb, _, L = x_ref.shape
    G = w2_ref.shape[1]

    # Static unroll over the Bb batch rows of this block; every op below is a
    # plain 2-D (channels x L) tile op -> transpose-free matmuls, simple
    # lowering.  Bb is capped small in the wrapper.
    for i in range(bb):
        x = x_ref[i]                                        # (Cin, L)
        h1 = jnp.maximum(x.astype(f32) * s1 + b1, 0.0)      # bn1 + relu
        y1 = jnp.dot(w1, h1, preferred_element_type=f32)    # conv1 (k=1)
        h2 = jnp.maximum(y1 * s2 + b2, 0.0)                 # bn2 + relu

        # conv2: kernel=3, padding=1 -> three matmuls on zero-padded shifts.
        zcol = jnp.zeros((h2.shape[0], 1), f32)
        h2_prev = jnp.concatenate([zcol, h2[:, : L - 1]], axis=1)  # h2[l-1]
        h2_next = jnp.concatenate([h2[:, 1:], zcol], axis=1)       # h2[l+1]
        y2 = (jnp.dot(w2_m1, h2_prev, preferred_element_type=f32)
              + jnp.dot(w2_c, h2, preferred_element_type=f32)
              + jnp.dot(w2_p1, h2_next, preferred_element_type=f32))

        # torch.cat([out, x], dim=1)
        o_ref[i, 0:G, :] = y2.astype(o_ref.dtype)
        o_ref[i, G:, :] = x.astype(o_ref.dtype)


def _pick_block_batch(B, cin, cout, L, itemsize, target_bytes=1 << 20,
                      max_bb=8):
    """Largest divisor of B giving a ~1 MB block, while keeping >= 2 grid
    steps when B >= 2 so both TensorCores (v7x megacore) get work."""
    per_sample = (cin + cout) * L * itemsize
    bb = max(1, min(B, max_bb, target_bytes // max(per_sample, 1)))
    if B >= 2:
        bb = min(bb, max(1, B // 2))
    while B % bb:
        bb -= 1
    return bb


def bottleneck_forward(x, params, *, eps=1e-5):
    """JAX/Pallas equivalent of Bottleneck.forward (activation='relu', eval BN)."""
    B, cin, L = x.shape
    w1 = params["conv1_w"]                      # (Cmid, Cin)
    w2 = params["conv2_w"]                      # (G, Cmid, 3)  (PyTorch OIH)
    cmid = w1.shape[0]
    g = w2.shape[0]
    cout = g + cin

    g1, be1, m1, v1 = params["bn1"]
    g2, be2, m2, v2 = params["bn2"]
    inv1 = g1 / jnp.sqrt(v1 + eps)
    inv2 = g2 / jnp.sqrt(v2 + eps)
    s1 = inv1.reshape(cin, 1).astype(jnp.float32)
    b1 = (be1 - m1 * inv1).reshape(cin, 1).astype(jnp.float32)
    s2 = inv2.reshape(cmid, 1).astype(jnp.float32)
    b2 = (be2 - m2 * inv2).reshape(cmid, 1).astype(jnp.float32)
    w2p = jnp.transpose(w2, (2, 0, 1)).astype(jnp.float32)   # (3, G, Cmid)

    bb = _pick_block_batch(B, cin, cout, L, x.dtype.itemsize)
    grid = (B // bb,)

    grid_spec = pltpu.PrefetchScalarGridSpec(
        num_scalar_prefetch=0,
        grid=grid,
        in_specs=[
            pl.BlockSpec((bb, cin, L), lambda i: (i, 0, 0)),   # x (batch-tiled)
            pl.BlockSpec((cin, 1), lambda i: (0, 0)),          # bn1 scale
            pl.BlockSpec((cin, 1), lambda i: (0, 0)),          # bn1 bias
            pl.BlockSpec((cmid, cin), lambda i: (0, 0)),       # conv1 weight
            pl.BlockSpec((cmid, 1), lambda i: (0, 0)),         # bn2 scale
            pl.BlockSpec((cmid, 1), lambda i: (0, 0)),         # bn2 bias
            pl.BlockSpec((3, g, cmid), lambda i: (0, 0, 0)),   # conv2 weight
        ],
        out_specs=pl.BlockSpec((bb, cout, L), lambda i: (i, 0, 0)),
    )

    return pl.pallas_call(
        _bottleneck_kernel,
        out_shape=jax.ShapeDtypeStruct((B, cout, L), x.dtype),
        grid_spec=grid_spec,
        compiler_params=pltpu.CompilerParams(
            dimension_semantics=("parallel",)),
    )(x, s1, b1, w1, s2, b2, w2p)


def _reference(x, params, eps=1e-5):
    """Plain-JAX reference of the fused forward, for validation."""
    g1, be1, m1, v1 = params["bn1"]
    g2, be2, m2, v2 = params["bn2"]
    w1 = params["conv1_w"]
    w2 = params["conv2_w"]
    hi = jax.lax.Precision.HIGHEST

    h = (x - m1[None, :, None]) * (g1 / jnp.sqrt(v1 + eps))[None, :, None] \
        + be1[None, :, None]
    h = jnp.maximum(h, 0.0)
    y1 = jnp.einsum("oc,bcl->bol", w1, h, precision=hi)
    h2 = (y1 - m2[None, :, None]) * (g2 / jnp.sqrt(v2 + eps))[None, :, None] \
        + be2[None, :, None]
    h2 = jnp.maximum(h2, 0.0)

    L = x.shape[2]
    h2p = jnp.pad(h2, ((0, 0), (0, 0), (1, 1)))
    y2 = sum(jnp.einsum("oc,bcl->bol", w2[:, :, k], h2p[:, :, k:k + L],
                        precision=hi) for k in range(3))
    return jnp.concatenate([y2, x], axis=1)


if __name__ == "__main__":
    key = jax.random.PRNGKey(0)
    B, in_planes, growth_rate, L = 2, 32, 8, 128
    cmid = 4 * growth_rate

    keys = jax.random.split(key, 11)
    x = jax.random.normal(keys[0], (B, in_planes, L), dtype=jnp.float32)
    params = {
        "bn1": (jax.random.uniform(keys[1], (in_planes,), minval=0.5, maxval=1.5),
                0.1 * jax.random.normal(keys[2], (in_planes,)),
                0.1 * jax.random.normal(keys[3], (in_planes,)),
                jax.random.uniform(keys[4], (in_planes,), minval=0.5, maxval=1.5)),
        "conv1_w": jax.random.normal(keys[5], (cmid, in_planes),
                                     dtype=jnp.float32) / jnp.sqrt(in_planes),
        "bn2": (jax.random.uniform(keys[6], (cmid,), minval=0.5, maxval=1.5),
                0.1 * jax.random.normal(keys[7], (cmid,)),
                0.1 * jax.random.normal(keys[8], (cmid,)),
                jax.random.uniform(keys[9], (cmid,), minval=0.5, maxval=1.5)),
        "conv2_w": jax.random.normal(keys[10], (growth_rate, cmid, 3),
                                     dtype=jnp.float32) / jnp.sqrt(3 * cmid),
    }

    out = jax.block_until_ready(bottleneck_forward(x, params))
    ref = _reference(x, params)

    assert out.shape == (B, growth_rate + in_planes, L)
    err = float(jnp.max(jnp.abs(out - ref)))
    assert jnp.allclose(out, ref, atol=1e-3, rtol=1e-3), f"max abs err {err}"
    print("KERNEL_OK")
</pallas_src>

<mosaic_0001>
module attributes {stable_mosaic.version = 11 : i64} {
  func.func @_bottleneck_kernel(%arg0: i32, %arg1: memref<1x32x128xf32, #tpu.memory_space<vmem>>, %arg2: memref<32x1xf32, #tpu.memory_space<vmem>>, %arg3: memref<32x1xf32, #tpu.memory_space<vmem>>, %arg4: memref<32x32xf32, #tpu.memory_space<vmem>>, %arg5: memref<32x1xf32, #tpu.memory_space<vmem>>, %arg6: memref<32x1xf32, #tpu.memory_space<vmem>>, %arg7: memref<3x8x32xf32, #tpu.memory_space<vmem>>, %arg8: memref<1x40x128xf32, #tpu.memory_space<vmem>>) attributes {dimension_semantics = [#tpu.dimension_semantics<parallel>], iteration_bounds = array<i64: 2>, scalar_prefetch = 0 : i64, scratch_operands = 0 : i64, tpu.core_type = #tpu.core_type<tc>, window_params = [{transform_indices = @transform_0, window_bounds = array<i64: 1, 32, 128>}, {pipeline_mode = #tpu.pipeline_mode<synchronous>, transform_indices = @transform_1, window_bounds = array<i64: 32, 1>}, {pipeline_mode = #tpu.pipeline_mode<synchronous>, transform_indices = @transform_2, window_bounds = array<i64: 32, 1>}, {pipeline_mode = #tpu.pipeline_mode<synchronous>, transform_indices = @transform_3, window_bounds = array<i64: 32, 32>}, {pipeline_mode = #tpu.pipeline_mode<synchronous>, transform_indices = @transform_4, window_bounds = array<i64: 32, 1>}, {pipeline_mode = #tpu.pipeline_mode<synchronous>, transform_indices = @transform_5, window_bounds = array<i64: 32, 1>}, {pipeline_mode = #tpu.pipeline_mode<synchronous>, transform_indices = @transform_6, window_bounds = array<i64: 3, 8, 32>}, {transform_indices = @transform_7, window_bounds = array<i64: 1, 40, 128>}]} {
    %c0 = arith.constant 0 : index
    %c0_0 = arith.constant 0 : index
    %0 = vector.load %arg2[%c0, %c0_0] : memref<32x1xf32, #tpu.memory_space<vmem>>, vector<32x1xf32>
    %c0_1 = arith.constant 0 : index
    %c0_2 = arith.constant 0 : index
    %1 = vector.load %arg3[%c0_1, %c0_2] : memref<32x1xf32, #tpu.memory_space<vmem>>, vector<32x1xf32>
    %c0_3 = arith.constant 0 : index
    %c0_4 = arith.constant 0 : index
    %2 = vector.load %arg4[%c0_3, %c0_4] : memref<32x32xf32, #tpu.memory_space<vmem>>, vector<32x32xf32>
    %c0_5 = arith.constant 0 : index
    %c0_6 = arith.constant 0 : index
    %3 = vector.load %arg5[%c0_5, %c0_6] : memref<32x1xf32, #tpu.memory_space<vmem>>, vector<32x1xf32>
    %c0_7 = arith.constant 0 : index
    %c0_8 = arith.constant 0 : index
    %4 = vector.load %arg6[%c0_7, %c0_8] : memref<32x1xf32, #tpu.memory_space<vmem>>, vector<32x1xf32>
    %c0_9 = arith.constant 0 : index
    %c0_10 = arith.constant 0 : index
    %c0_11 = arith.constant 0 : index
    %5 = vector.load %arg7[%c0_9, %c0_10, %c0_11] : memref<3x8x32xf32, #tpu.memory_space<vmem>>, vector<1x8x32xf32>
    %6 = vector.shape_cast %5 : vector<1x8x32xf32> to vector<8x32xf32>
    %c1 = arith.constant 1 : index
    %c0_12 = arith.constant 0 : index
    %c0_13 = arith.constant 0 : index
    %7 = vector.load %arg7[%c1, %c0_12, %c0_13] : memref<3x8x32xf32, #tpu.memory_space<vmem>>, vector<1x8x32xf32>
    %8 = vector.shape_cast %7 : vector<1x8x32xf32> to vector<8x32xf32>
    %c2 = arith.constant 2 : index
    %c0_14 = arith.constant 0 : index
    %c0_15 = arith.constant 0 : index
    %9 = vector.load %arg7[%c2, %c0_14, %c0_15] : memref<3x8x32xf32, #tpu.memory_space<vmem>>, vector<1x8x32xf32>
    %10 = vector.shape_cast %9 : vector<1x8x32xf32> to vector<8x32xf32>
    %c0_16 = arith.constant 0 : index
    %c0_17 = arith.constant 0 : index
    %c0_18 = arith.constant 0 : index
    %11 = vector.load %arg1[%c0_16, %c0_17, %c0_18] : memref<1x32x128xf32, #tpu.memory_space<vmem>>, vector<1x32x128xf32>
    %12 = vector.shape_cast %11 : vector<1x32x128xf32> to vector<32x128xf32>
    %13 = vector.broadcast %0 : vector<32x1xf32> to vector<32x128xf32>
    %14 = arith.mulf %12, %13 : vector<32x128xf32>
    %15 = vector.broadcast %1 : vector<32x1xf32> to vector<32x128xf32>
    %16 = arith.addf %14, %15 : vector<32x128xf32>
    %cst = arith.constant 0.000000e+00 : f32
    %17 = vector.broadcast %cst : f32 to vector<32x128xf32>
    %18 = arith.maximumf %16, %17 : vector<32x128xf32>
    %cst_19 = arith.constant dense<0.000000e+00> : vector<32x128xf32>
    %19 = tpu.matmul %2, %18, %cst_19 {dimension_numbers = #tpu.dot_dimension_numbers<[1], [0], [0], [1], [0, 0, 1, 1], [], []>} : vector<32x32xf32>, vector<32x128xf32>, vector<32x128xf32> -> vector<32x128xf32>
    %20 = vector.broadcast %3 : vector<32x1xf32> to vector<32x128xf32>
    %21 = arith.mulf %19, %20 : vector<32x128xf32>
    %22 = vector.broadcast %4 : vector<32x1xf32> to vector<32x128xf32>
    %23 = arith.addf %21, %22 : vector<32x128xf32>
    %cst_20 = arith.constant 0.000000e+00 : f32
    %24 = vector.broadcast %cst_20 : f32 to vector<32x128xf32>
    %25 = arith.maximumf %23, %24 : vector<32x128xf32>
    %cst_21 = arith.constant 0.000000e+00 : f32
    %26 = vector.broadcast %cst_21 : f32 to vector<32x1xf32>
    %27 = vector.extract_strided_slice %25 {offsets = [0, 0], sizes = [32, 127], strides = [1, 1]} : vector<32x128xf32> to vector<32x127xf32>
    %28 = tpu.concatenate %26, %27 in 1 : vector<32x1xf32>, vector<32x127xf32> -> vector<32x128xf32>
    %29 = vector.extract_strided_slice %25 {offsets = [0, 1], sizes = [32, 127], strides = [1, 1]} : vector<32x128xf32> to vector<32x127xf32>
    %30 = tpu.concatenate %29, %26 in 1 : vector<32x127xf32>, vector<32x1xf32> -> vector<32x128xf32>
    %cst_22 = arith.constant dense<0.000000e+00> : vector<8x128xf32>
    %31 = tpu.matmul %6, %28, %cst_22 {dimension_numbers = #tpu.dot_dimension_numbers<[1], [0], [0], [1], [0, 0, 1, 1], [], []>} : vector<8x32xf32>, vector<32x128xf32>, vector<8x128xf32> -> vector<8x128xf32>
    %cst_23 = arith.constant dense<0.000000e+00> : vector<8x128xf32>
    %32 = tpu.matmul %8, %25, %cst_23 {dimension_numbers = #tpu.dot_dimension_numbers<[1], [0], [0], [1], [0, 0, 1, 1], [], []>} : vector<8x32xf32>, vector<32x128xf32>, vector<8x128xf32> -> vector<8x128xf32>
    %33 = arith.addf %31, %32 : vector<8x128xf32>
    %cst_24 = arith.constant dense<0.000000e+00> : vector<8x128xf32>
    %34 = tpu.matmul %10, %30, %cst_24 {dimension_numbers = #tpu.dot_dimension_numbers<[1], [0], [0], [1], [0, 0, 1, 1], [], []>} : vector<8x32xf32>, vector<32x128xf32>, vector<8x128xf32> -> vector<8x128xf32>
    %35 = arith.addf %33, %34 : vector<8x128xf32>
    %c0_25 = arith.constant 0 : index
    %c0_26 = arith.constant 0 : index
    %c0_27 = arith.constant 0 : index
    %36 = vector.load %arg8[%c0_25, %c0_26, %c0_27] : memref<1x40x128xf32, #tpu.memory_space<vmem>>, vector<1x8x128xf32>
    %37 = vector.shape_cast %36 : vector<1x8x128xf32> to vector<8x128xf32>
    %38 = vector.shape_cast %35 : vector<8x128xf32> to vector<1x8x128xf32>
    tpu.vector_store %arg8[%c0_25, %c0_26, %c0_27], %38 {strides = array<i32>} : memref<1x40x128xf32, #tpu.memory_space<vmem>>, vector<1x8x128xf32>,
    %c0_28 = arith.constant 0 : index
    %c8 = arith.constant 8 : index
    %c0_29 = arith.constant 0 : index
    %39 = vector.load %arg8[%c0_28, %c8, %c0_29] : memref<1x40x128xf32, #tpu.memory_space<vmem>>, vector<1x32x128xf32>
    %40 = vector.shape_cast %39 : vector<1x32x128xf32> to vector<32x128xf32>
    %41 = vector.shape_cast %12 : vector<32x128xf32> to vector<1x32x128xf32>
    tpu.vector_store %arg8[%c0_28, %c8, %c0_29], %41 {strides = array<i32>} : memref<1x40x128xf32, #tpu.memory_space<vmem>>, vector<1x32x128xf32>,
    return
  }
  func.func @transform_0(%arg0: i32) -> (i32, i32, i32) {
    %c0_i32 = arith.constant 0 : i32
    %c0_i32_0 = arith.constant 0 : i32
    %c0_i32_1 = arith.constant 0 : i32
    return %arg0, %c0_i32, %c0_i32_0 : i32, i32, i32
  }
  func.func @transform_1(%arg0: i32) -> (i32, i32) {
    %c0_i32 = arith.constant 0 : i32
    %c0_i32_0 = arith.constant 0 : i32
    %c0_i32_1 = arith.constant 0 : i32
    return %c0_i32, %c0_i32_0 : i32, i32
  }
  func.func @transform_2(%arg0: i32) -> (i32, i32) {
    %c0_i32 = arith.constant 0 : i32
    %c0_i32_0 = arith.constant 0 : i32
    %c0_i32_1 = arith.constant 0 : i32
    return %c0_i32, %c0_i32_0 : i32, i32
  }
  func.func @transform_3(%arg0: i32) -> (i32, i32) {
    %c0_i32 = arith.constant 0 : i32
    %c0_i32_0 = arith.constant 0 : i32
    %c0_i32_1 = arith.constant 0 : i32
    return %c0_i32, %c0_i32_0 : i32, i32
  }
  func.func @transform_4(%arg0: i32) -> (i32, i32) {
    %c0_i32 = arith.constant 0 : i32
    %c0_i32_0 = arith.constant 0 : i32
    %c0_i32_1 = arith.constant 0 : i32
    return %c0_i32, %c0_i32_0 : i32, i32
  }
  func.func @transform_5(%arg0: i32) -> (i32, i32) {
    %c0_i32 = arith.constant 0 : i32
    %c0_i32_0 = arith.constant 0 : i32
    %c0_i32_1 = arith.constant 0 : i32
    return %c0_i32, %c0_i32_0 : i32, i32
  }
  func.func @transform_6(%arg0: i32) -> (i32, i32, i32) {
    %c0_i32 = arith.constant 0 : i32
    %c0_i32_0 = arith.constant 0 : i32
    %c0_i32_1 = arith.constant 0 : i32
    %c0_i32_2 = arith.constant 0 : i32
    return %c0_i32, %c0_i32_0, %c0_i32_1 : i32, i32, i32
  }
  func.func @transform_7(%arg0: i32) -> (i32, i32, i32) {
    %c0_i32 = arith.constant 0 : i32
    %c0_i32_0 = arith.constant 0 : i32
    %c0_i32_1 = arith.constant 0 : i32
    return %arg0, %c0_i32, %c0_i32_0 : i32, i32, i32
  }
}

</mosaic_0001>

<llo_original>
// kernel: tpu_custom_call.1
$region0: #{tpu_custom_call.1}
  #allocation0 [shape = 'u32[]', space=smem, size = 0x4, offset = 0x4, fixed_abs, tag = 'smem constant byte address 0x4 - core index']
  #allocation1 [shape = 'u32[144,128]{1,0:T(1,128)}', space=vmem, size = 0x12000, scoped, tag = 'internal scratch']
  %s0 = inlined_call_operand.vmem [shape: f32[2,32,128], index: 0, kind: input, shape index: {}]
  %s1 = inlined_call_operand.vmem [shape: f32[32,1], index: 1, kind: input, shape index: {}]
  %s2 = inlined_call_operand.vmem [shape: f32[32,1], index: 2, kind: input, shape index: {}]
  %s3 = inlined_call_operand.vmem [shape: f32[32,32], index: 3, kind: input, shape index: {}]
  %s4 = inlined_call_operand.vmem [shape: f32[32,1], index: 4, kind: input, shape index: {}]
  %s5 = inlined_call_operand.vmem [shape: f32[32,1], index: 5, kind: input, shape index: {}]
  %s6 = inlined_call_operand.vmem [shape: f32[3,8,32], index: 6, kind: input, shape index: {}]
  %s7 = inlined_call_operand.hbm [shape: f32[2,40,128], index: 7, kind: output, shape index: {}]
  %s8 = sld [smem:[#allocation0]]
  $region61: #{tpu_custom_call.1} parent=0
    _
  %s10 = ssub.s32 1, %s8
  %s11 = scalar_select 0, %s10, %s8
  $region1: #{tpu_custom_call.1} parent=0
    #allocation2 [shape = 'u8[40960]{0}', space=vmem, size = 0xa000, scoped, tag = 'output window, operand 0']
    #allocation3 [shape = 's32[2]{0}', space=sflag, size = 0x8, scoped, tag = 'scoped memory for tpu_custom_call.1']
    %12 = vsyncpa [#allocation3], 0
    %s13 = scalar_lea.sflag [#allocation3], 1
    %14 = vsyncpa %s13, 0
    loop: start=0, step=1, limit=4
    $region2: #{tpu_custom_call.1} parent=1 // loop_pre_header
      _
    $region3: #{tpu_custom_call.1} parent=1 // loop_header
      %s16 = sphi 0, %s20
      %p17 = scmp.ge.s32.totalorder %s16, 4
      %s26 = sphi 0, %s28
      %s29 = sphi 0, %s26
      %s30 = sphi 0, %s29
      %s46 = sphi 0, %s30
      %s50 = sphi 0, %s50
      %s52 = sphi 0, %s50
      %s53 = sphi 0, %s52
      %s67 = sphi 0, %s53
      %s71 = sphi 0, %s71
      %s73 = sphi 0, %s71
      %s74 = sphi 0, %s73
      %s88 = sphi 0, %s74
      %s92 = sphi 0, %s92
      %s94 = sphi 0, %s92
      %s95 = sphi 0, %s94
      %s109 = sphi 0, %s95
      %s113 = sphi 0, %s113
      %s115 = sphi 0, %s113
      %s116 = sphi 0, %s115
      %s130 = sphi 0, %s116
      %s134 = sphi 0, %s134
      %s136 = sphi 0, %s134
      %s137 = sphi 0, %s136
      %s151 = sphi 0, %s137
      %s155 = sphi 0, %s155
      %s157 = sphi 0, %s155
      %s158 = sphi 0, %s157
      %s172 = sphi 0, %s158
      %s178 = sphi 0, %s180
      %s181 = sphi 0, %s178
      %s182 = sphi 0, %s181
      %s198 = sphi 0, %s182
    $region4: #{tpu_custom_call.1} parent=1 // loop_header_branch
      %19 = sbr.rel (%p17) target = $region8
    $region5: #{tpu_custom_call.1} parent=1 // loop_body
      %s21 = ssub.s32 %s16, 1
      %s22 = ssub.s32 %s16, 2
      %s23 = sadd.s32 %s16, 1
      %s24 = ssub.s32 %s16, %s23
      %p25 = scmp.eq.s32.totalorder %s24, 0
      %s27 = sadd.s32 %s26, 1
      %s28 = scalar_select %p25, %s26, %s27
      %p31 = pneg %p25
      %p32 = scmp.eq.s32.totalorder %s16, 1
      %p33 = por %p31, %p32
      %p34 = scmp.ne.s32.totalorder %s26, %s29
      %p35 = scmp.eq.s32.totalorder %s16, 0
      %p36 = por %p34, %p35
      %p37 = scmp.ne.s32.totalorder %s26, %s29
      %p38 = scmp.eq.s32.totalorder %s21, 1
      %p39 = por %p37, %p38
      %p40 = scmp.ne.s32.totalorder %s29, %s30
      %p41 = scmp.eq.s32.totalorder %s21, 0
      %p42 = por %p40, %p41
      %p43 = scmp.ne.s32.totalorder %s29, %s30
      %p44 = scmp.eq.s32.totalorder %s22, 1
      %p45 = por %p43, %p44
      %p47 = scmp.ne.s32.totalorder %s30, %s46
      %p48 = scmp.eq.s32.totalorder %s22, 0
      %p49 = por %p47, %p48
      %s51 = sadd.s32 %s50, 1
      %p54 = scmp.eq.s32.totalorder %s16, 1
      %p55 = scmp.ne.s32.totalorder %s50, %s52
      %p56 = scmp.eq.s32.totalorder %s16, 0
      %p57 = por %p55, %p56
      %p58 = scmp.ne.s32.totalorder %s50, %s52
      %p59 = scmp.eq.s32.totalorder %s21, 1
      %p60 = por %p58, %p59
      %p61 = scmp.ne.s32.totalorder %s52, %s53
      %p62 = scmp.eq.s32.totalorder %s21, 0
      %p63 = por %p61, %p62
      %p64 = scmp.ne.s32.totalorder %s52, %s53
      %p65 = scmp.eq.s32.totalorder %s22, 1
      %p66 = por %p64, %p65
      %p68 = scmp.ne.s32.totalorder %s53, %s67
      %p69 = scmp.eq.s32.totalorder %s22, 0
      %p70 = por %p68, %p69
      %s72 = sadd.s32 %s71, 1
      %p75 = scmp.eq.s32.totalorder %s16, 1
      %p76 = scmp.ne.s32.totalorder %s71, %s73
      %p77 = scmp.eq.s32.totalorder %s16, 0
      %p78 = por %p76, %p77
      %p79 = scmp.ne.s32.totalorder %s71, %s73
      %p80 = scmp.eq.s32.totalorder %s21, 1
      %p81 = por %p79, %p80
      %p82 = scmp.ne.s32.totalorder %s73, %s74
      %p83 = scmp.eq.s32.totalorder %s21, 0
      %p84 = por %p82, %p83
      %p85 = scmp.ne.s32.totalorder %s73, %s74
      %p86 = scmp.eq.s32.totalorder %s22, 1
      %p87 = por %p85, %p86
      %p89 = scmp.ne.s32.totalorder %s74, %s88
      %p90 = scmp.eq.s32.totalorder %s22, 0
      %p91 = por %p89, %p90
      %s93 = sadd.s32 %s92, 1
      %p96 = scmp.eq.s32.totalorder %s16, 1
      %p97 = scmp.ne.s32.totalorder %s92, %s94
      %p98 = scmp.eq.s32.totalorder %s16, 0
      %p99 = por %p97, %p98
      %p100 = scmp.ne.s32.totalorder %s92, %s94
      %p101 = scmp.eq.s32.totalorder %s21, 1
      %p102 = por %p100, %p101
      %p103 = scmp.ne.s32.totalorder %s94, %s95
      %p104 = scmp.eq.s32.totalorder %s21, 0
      %p105 = por %p103, %p104
      %p106 = scmp.ne.s32.totalorder %s94, %s95
      %p107 = scmp.eq.s32.totalorder %s22, 1
      %p108 = por %p106, %p107
      %p110 = scmp.ne.s32.totalorder %s95, %s109
      %p111 = scmp.eq.s32.totalorder %s22, 0
      %p112 = por %p110, %p111
      %s114 = sadd.s32 %s113, 1
      %p117 = scmp.eq.s32.totalorder %s16, 1
      %p118 = scmp.ne.s32.totalorder %s113, %s115
      %p119 = scmp.eq.s32.totalorder %s16, 0
      %p120 = por %p118, %p119
      %p121 = scmp.ne.s32.totalorder %s113, %s115
      %p122 = scmp.eq.s32.totalorder %s21, 1
      %p123 = por %p121, %p122
      %p124 = scmp.ne.s32.totalorder %s115, %s116
      %p125 = scmp.eq.s32.totalorder %s21, 0
      %p126 = por %p124, %p125
      %p127 = scmp.ne.s32.totalorder %s115, %s116
      %p128 = scmp.eq.s32.totalorder %s22, 1
      %p129 = por %p127, %p128
      %p131 = scmp.ne.s32.totalorder %s116, %s130
      %p132 = scmp.eq.s32.totalorder %s22, 0
      %p133 = por %p131, %p132
      %s135 = sadd.s32 %s134, 1
      %p138 = scmp.eq.s32.totalorder %s16, 1
      %p139 = scmp.ne.s32.totalorder %s134, %s136
      %p140 = scmp.eq.s32.totalorder %s16, 0
      %p141 = por %p139, %p140
      %p142 = scmp.ne.s32.totalorder %s134, %s136
      %p143 = scmp.eq.s32.totalorder %s21, 1
      %p144 = por %p142, %p143
      %p145 = scmp.ne.s32.totalorder %s136, %s137
      %p146 = scmp.eq.s32.totalorder %s21, 0
      %p147 = por %p145, %p146
      %p148 = scmp.ne.s32.totalorder %s136, %s137
      %p149 = scmp.eq.s32.totalorder %s22, 1
      %p150 = por %p148, %p149
      %p152 = scmp.ne.s32.totalorder %s137, %s151
      %p153 = scmp.eq.s32.totalorder %s22, 0
      %p154 = por %p152, %p153
      %s156 = sadd.s32 %s155, 1
      %p159 = scmp.eq.s32.totalorder %s16, 1
      %p160 = scmp.ne.s32.totalorder %s155, %s157
      %p161 = scmp.eq.s32.totalorder %s16, 0
      %p162 = por %p160, %p161
      %p163 = scmp.ne.s32.totalorder %s155, %s157
      %p164 = scmp.eq.s32.totalorder %s21, 1
      %p165 = por %p163, %p164
      %p166 = scmp.ne.s32.totalorder %s157, %s158
      %p167 = scmp.eq.s32.totalorder %s21, 0
      %p168 = por %p166, %p167
      %p169 = scmp.ne.s32.totalorder %s157, %s158
      %p170 = scmp.eq.s32.totalorder %s22, 1
      %p171 = por %p169, %p170
      %p173 = scmp.ne.s32.totalorder %s158, %s172
      %p174 = scmp.eq.s32.totalorder %s22, 0
      %p175 = por %p173, %p174
      %s176 = ssub.s32 %s16, %s23
      %p177 = scmp.eq.s32.totalorder %s176, 0
      %s179 = sadd.s32 %s178, 1
      %s180 = scalar_select %p177, %s178, %s179
      %p183 = pneg %p177
      %p184 = scmp.eq.s32.totalorder %s16, 1
      %p185 = por %p183, %p184
      %p186 = scmp.ne.s32.totalorder %s178, %s181
      %p187 = scmp.eq.s32.totalorder %s16, 0
      %p188 = por %p186, %p187
      %p189 = scmp.ne.s32.totalorder %s178, %s181
      %p190 = scmp.eq.s32.totalorder %s21, 1
      %p191 = por %p189, %p190
      %p192 = scmp.ne.s32.totalorder %s181, %s182
      %p193 = scmp.eq.s32.totalorder %s21, 0
      %p194 = por %p192, %p193
      %p195 = scmp.ne.s32.totalorder %s181, %s182
      %p196 = scmp.eq.s32.totalorder %s22, 1
      %p197 = por %p195, %p196
      %p199 = scmp.ne.s32.totalorder %s182, %s198
      %p200 = scmp.eq.s32.totalorder %s22, 0
      %p201 = por %p199, %p200
      %p202 = scmp.le.s32.totalorder 1, %s16
      %p203 = scmp.lt.s32.totalorder %s16, 3
      %p204 = pnand %p202, %p203
      %p205 = pneg %p204
      // Predicated region
      $region9: #{tpu_custom_call.1} parent=5 // pred_check
        _
      $region10: #{tpu_custom_call.1} parent=5 // pred_check_branch
        %207 = sbr.rel (%p204) target = $region12
      $region11: #{tpu_custom_call.1} parent=5 // pred_region
        %s208 = ssub.s32 %s16, 1
        // Predicated region
        $region13: #{tpu_custom_call.1} parent=11 // pred_check
          %p209 = pneg %p63
        $region14: #{tpu_custom_call.1} parent=11 // pred_check_branch
          %211 = sbr.rel (%p209) target = $region16
        $region15: #{tpu_custom_call.1} parent=11 // pred_region
          _
        $region16: #{tpu_custom_call.1} parent=11 // pred_fallthru
          _
        // Predicated region
        $region17: #{tpu_custom_call.1} parent=11 // pred_check
          %p212 = pneg %p84
        $region18: #{tpu_custom_call.1} parent=11 // pred_check_branch
          %214 = sbr.rel (%p212) target = $region20
        $region19: #{tpu_custom_call.1} parent=11 // pred_region
          _
        $region20: #{tpu_custom_call.1} parent=11 // pred_fallthru
          _
        // Predicated region
        $region21: #{tpu_custom_call.1} parent=11 // pred_check
          %p215 = pneg %p105
        $region22: #{tpu_custom_call.1} parent=11 // pred_check_branch
          %217 = sbr.rel (%p215) target = $region24
        $region23: #{tpu_custom_call.1} parent=11 // pred_region
          _
        $region24: #{tpu_custom_call.1} parent=11 // pred_fallthru
          _
        // Predicated region
        $region25: #{tpu_custom_call.1} parent=11 // pred_check
          %p218 = pneg %p126
        $region26: #{tpu_custom_call.1} parent=11 // pred_check_branch
          %220 = sbr.rel (%p218) target = $region28
        $region27: #{tpu_custom_call.1} parent=11 // pred_region
          _
        $region28: #{tpu_custom_call.1} parent=11 // pred_fallthru
          _
        // Predicated region
        $region29: #{tpu_custom_call.1} parent=11 // pred_check
          %p221 = pneg %p147
        $region30: #{tpu_custom_call.1} parent=11 // pred_check_branch
          %223 = sbr.rel (%p221) target = $region32
        $region31: #{tpu_custom_call.1} parent=11 // pred_region
          _
        $region32: #{tpu_custom_call.1} parent=11 // pred_fallthru
          _
        // Predicated region
        $region33: #{tpu_custom_call.1} parent=11 // pred_check
          %p224 = pneg %p168
        $region34: #{tpu_custom_call.1} parent=11 // pred_check_branch
          %226 = sbr.rel (%p224) target = $region36
        $region35: #{tpu_custom_call.1} parent=11 // pred_region
          _
        $region36: #{tpu_custom_call.1} parent=11 // pred_fallthru
          _
      $region12: #{tpu_custom_call.1} parent=5 // pred_fallthru
        _
      %p227 = scmp.lt.s32.totalorder %s16, 2
      // Predicated region
      $region37: #{tpu_custom_call.1} parent=5 // pred_check
        %p228 = pneg %p227
      $region38: #{tpu_custom_call.1} parent=5 // pred_check_branch
        %230 = sbr.rel (%p228) target = $region40
      $region39: #{tpu_custom_call.1} parent=5 // pred_region
        // Predicated region
        $region41: #{tpu_custom_call.1} parent=39 // pred_check
          %p231 = pneg %p36
        $region42: #{tpu_custom_call.1} parent=39 // pred_check_branch
          %233 = sbr.rel (%p231) target = $region44
        $region43: #{tpu_custom_call.1} parent=39 // pred_region
          %p234 = scmp.lt.s32.totalorder %s16, 1
          %s235 = scalar_select %p234, %s16, 1
          %s236 = smul.addr %s235, 4
          %s237 = smul.addr %s236, 8
          %s238 = scalar_lea.vmem %s0, %s237
        $region44: #{tpu_custom_call.1} parent=39 // pred_fallthru
          _
      $region40: #{tpu_custom_call.1} parent=5 // pred_fallthru
        _
      %p239 = scmp.le.s32.totalorder 1, %s16
      %p240 = scmp.lt.s32.totalorder %s16, 3
      %p241 = pnand %p239, %p240
      %p242 = pneg %p241
      // Predicated region
      $region45: #{tpu_custom_call.1} parent=5 // pred_check
        _
      $region46: #{tpu_custom_call.1} parent=5 // pred_check_branch
        %244 = sbr.rel (%p241) target = $region48
      $region47: #{tpu_custom_call.1} parent=5 // pred_region
        %s245 = ssub.s32 %s16, 1
        %p246 = scmp.lt.s32.totalorder %s21, 1
        %s247 = scalar_select %p246, %s21, 1
        %s248 = smul.addr %s247, 4
        %s249 = smul.addr %s248, 8
        %s250 = scalar_lea.vmem %s0, %s249
        %p251 = pneg %p42
        %p252 = pneg %p39
        %p253 = pneg %p63
        %p254 = pneg %p60
        %p255 = pneg %p84
        %p256 = pneg %p81
        %p257 = pneg %p105
        %p258 = pneg %p102
        %p259 = pneg %p126
        %p260 = pneg %p123
        %p261 = pneg %p147
        %p262 = pneg %p144
        %p263 = pneg %p168
        %p264 = pneg %p165
        %p265 = pneg %p194
        %p266 = pneg %p191
        %s267 = sand.u32 %s181, 1
        %s268 = scalar_lea.sflag [#allocation3], %s267
        %s269 = sand.u32 %s181, 1
        %s270 = smul.addr %s269, 40
        %s271 = scalar_lea.vmem [#allocation2], %s270
        %p272 = scmp.lt.s32.totalorder %s21, 1
        %s273 = scalar_select %p272, %s21, 1
        %s274 = smul.addr %s273, 4
        %s275 = smul.addr %s274, 8
        %s276 = scalar_lea.vmem %s0, %s275
        %v277 = vld [vmem:[%s1] sm:$0xff]
        %v278 = vld [vmem:[%s1 + $0x8] sm:$0xff]
        %v279 = vld [vmem:[%s1 + $0x10] sm:$0xff]
        %v280 = vld [vmem:[%s1 + $0x18] sm:$0xff]
        %v281 = vld [vmem:[%s2] sm:$0xff]
        %v282 = vld [vmem:[%s2 + $0x8] sm:$0xff]
        %v283 = vld [vmem:[%s2 + $0x10] sm:$0xff]
        %v284 = vld [vmem:[%s2 + $0x18] sm:$0xff]
        %v285 = vld [vmem:[%s3] sm:$0xff]
        %v286 = vld [vmem:[%s3 + $0x8] sm:$0xff]
        %v287 = vld [vmem:[%s3 + $0x10] sm:$0xff]
        %v288 = vld [vmem:[%s3 + $0x18] sm:$0xff]
        %v289 = vld [vmem:[%s4] sm:$0xff]
        %v290 = vld [vmem:[%s4 + $0x8] sm:$0xff]
        %v291 = vld [vmem:[%s4 + $0x10] sm:$0xff]
        %v292 = vld [vmem:[%s4 + $0x18] sm:$0xff]
        %v293 = vld [vmem:[%s5] sm:$0xff]
        %v294 = vld [vmem:[%s5 + $0x8] sm:$0xff]
        %v295 = vld [vmem:[%s5 + $0x10] sm:$0xff]
        %v296 = vld [vmem:[%s5 + $0x18] sm:$0xff]
        %v297 = vld [vmem:[%s6] sm:$0xff]
        %s298 = scalar_lea.vmem %s6, 8
        %v299 = vld [vmem:[%s298] sm:$0xff]
        %s300 = scalar_lea.vmem %s6, 16
        %v301 = vld [vmem:[%s300] sm:$0xff]
        %v302 = vld [vmem:[%s276] sm:$0xff]
        %v303 = vld [vmem:[%s276 + $0x8] sm:$0xff]
        %v304 = vld [vmem:[%s276 + $0x10] sm:$0xff]
        %v305 = vld [vmem:[%s276 + $0x18] sm:$0xff]
        %307 = vset.pattern.permute.xlu0 0
        %308 = vperm.xlu0 %307, %v277
        %v309 = vpop.permute.xlu0 %308
        %312 = vset.pattern.permute.xlu0 0
        %313 = vperm.xlu0 %312, %v278
        %v314 = vpop.permute.xlu0 %313
        %317 = vset.pattern.permute.xlu0 0
        %318 = vperm.xlu0 %317, %v279
        %v319 = vpop.permute.xlu0 %318
        %322 = vset.pattern.permute.xlu0 0
        %323 = vperm.xlu0 %322, %v280
        %v324 = vpop.permute.xlu0 %323
        %v326 = vmul.f32 %v302, %v309
        %v327 = vmul.f32 %v303, %v314
        %v328 = vmul.f32 %v304, %v319
        %v329 = vmul.f32 %v305, %v324
        %331 = vset.pattern.permute.xlu0 0
        %332 = vperm.xlu0 %331, %v281
        %v333 = vpop.permute.xlu0 %332
        %336 = vset.pattern.permute.xlu0 0
        %337 = vperm.xlu0 %336, %v282
        %v338 = vpop.permute.xlu0 %337
        %341 = vset.pattern.permute.xlu0 0
        %342 = vperm.xlu0 %341, %v283
        %v343 = vpop.permute.xlu0 %342
        %346 = vset.pattern.permute.xlu0 0
        %347 = vperm.xlu0 %346, %v284
        %v348 = vpop.permute.xlu0 %347
        %v350 = vadd.f32 %v326, %v333
        %v351 = vadd.f32 %v327, %v338
        %v352 = vadd.f32 %v328, %v343
        %v353 = vadd.f32 %v329, %v348
        %v354 = vmax.f32 %v350, 0.0
        %v355 = vmax.f32 %v351, 0.0
        %v356 = vmax.f32 %v352, 0.0
        %v357 = vmax.f32 %v353, 0.0
        %vm358 = vcmask 261120
        %v360 = vsel %vm358, %v285, 0
        %v363 = vsel %vm358, %v286, 0
        %v366 = vsel %vm358, %v287, 0
        %v369 = vsel %vm358, %v288, 0
        %371 = vmatprep.subr.mxu0 0.0
        %372 = vmatpush1.msra.mxu0 0.0
        %373 = vmatprep.subr.mxu0 0.0
        %374 = vmatpush1.msra.mxu0 0.0
        %375 = vmatprep.subr.mxu0 0.0
        %376 = vmatpush1.msra.mxu0 0.0
        %377 = vmatprep.subr.mxu0 0.0
        %378 = vmatpush1.msra.mxu0 0.0
        %379 = vmatprep.subr.mxu0 0.0
        %380 = vmatpush1.msra.mxu0 0.0
        %381 = vmatprep.subr.mxu0 0.0
        %382 = vmatpush1.msra.mxu0 0.0
        %383 = vmatprep.subr.mxu0 0.0
        %384 = vmatpush1.msra.mxu0 0.0
        %385 = vmatprep.subr.mxu0 0.0
        %386 = vmatpush1.msra.mxu0 0.0
        %387 = vmatprep.subr.mxu0 0.0
        %388 = vmatpush1.msra.mxu0 0.0
        %389 = vmatprep.subr.mxu0 0.0
        %390 = vmatpush1.msra.mxu0 0.0
        %391 = vmatprep.subr.mxu0 0.0
        %392 = vmatpush1.msra.mxu0 0.0
        %393 = vmatprep.subr.mxu0 0.0
        %394 = vmatpush1.msra.mxu0 0.0
        %395 = vmatprep.subr.mxu0 0.0
        %396 = vmatpush1.msra.mxu0 %v357
        %397 = vmatprep.subr.mxu0 0.0
        %398 = vmatpush1.msra.mxu0 %v356
        %399 = vmatprep.subr.mxu0 0.0
        %400 = vmatpush1.msra.mxu0 %v355
        %401 = vmatprep.subr.mxu0 0.0
        %402 = vmatpush1.msra.mxu0 %v354
        %403 = vmatprep.subr.mxu0 0.0
        %404 = vmatpush2.msra.mxu0 0.0
        %405 = vmatprep.subr.mxu0 0.0
        %406 = vmatpush2.msra.mxu0 0.0
        %407 = vmatprep.subr.mxu0 0.0
        %408 = vmatpush2.msra.mxu0 0.0
        %409 = vmatprep.subr.mxu0 0.0
        %410 = vmatpush2.msra.mxu0 0.0
        %411 = vmatprep.subr.mxu0 0.0
        %412 = vmatpush2.msra.mxu0 0.0
        %413 = vmatprep.subr.mxu0 0.0
        %414 = vmatpush2.msra.mxu0 0.0
        %415 = vmatprep.subr.mxu0 0.0
        %416 = vmatpush2.msra.mxu0 0.0
        %417 = vmatprep.subr.mxu0 0.0
        %418 = vmatpush2.msra.mxu0 0.0
        %419 = vmatprep.subr.mxu0 0.0
        %420 = vmatpush2.msra.mxu0 0.0
        %421 = vmatprep.subr.mxu0 0.0
        %422 = vmatpush2.msra.mxu0 0.0
        %423 = vmatprep.subr.mxu0 0.0
        %424 = vmatpush2.msra.mxu0 0.0
        %425 = vmatprep.subr.mxu0 0.0
        %426 = vmatpush2.msra.mxu0 0.0
        %427 = vmatprep.subr.mxu0 0.0
        %428 = vmatpush2.msra.mxu0 0.0
        %429 = vmatprep.subr.mxu0 0.0
        %430 = vmatpush2.msra.mxu0 0.0
        %431 = vmatprep.subr.mxu0 0.0
        %432 = vmatpush2.msra.mxu0 0.0
        %433 = vmatprep.subr.mxu0 0.0
        %434 = vmatpush2.msra.mxu0 0.0
        %435 = vmatprep.mubr.f32.mxu0 0.0
        %436 = vmatmul.mubr.f32.gmra.mxu0 %v360
        %v437 = vpop.f32.mrf.mxu0
        %v438 = vadd.f32 0.0, %v437
        %v439 = vpop.f32.mrf.mxu0
        %440 = vmatprep.mubr.f32.mxu0 0.0
        %441 = vmatmul.mubr.f32.gmra.mxu0 %v363
        %v442 = vpop.f32.mrf.mxu0
        %v443 = vadd.f32 0.0, %v442
        %v444 = vpop.f32.mrf.mxu0
        %445 = vmatprep.mubr.f32.mxu0 0.0
        %446 = vmatmul.mubr.f32.gmra.mxu0 %v366
        %v447 = vpop.f32.mrf.mxu0
        %v448 = vadd.f32 0.0, %v447
        %v449 = vpop.f32.mrf.mxu0
        %450 = vmatprep.mubr.f32.mxu0 0.0
        %451 = vmatmul.mubr.f32.gmra.mxu0 %v369
        %v452 = vpop.f32.mrf.mxu0
        %v453 = vadd.f32 0.0, %v452
        %v454 = vpop.f32.mrf.mxu0
        %455 = vdwg.mxu0
        %457 = vset.pattern.permute.xlu0 0
        %458 = vperm.xlu0 %457, %v289
        %v459 = vpop.permute.xlu0 %458
        %462 = vset.pattern.permute.xlu0 0
        %463 = vperm.xlu0 %462, %v290
        %v464 = vpop.permute.xlu0 %463
        %467 = vset.pattern.permute.xlu0 0
        %468 = vperm.xlu0 %467, %v291
        %v469 = vpop.permute.xlu0 %468
        %472 = vset.pattern.permute.xlu0 0
        %473 = vperm.xlu0 %472, %v292
        %v474 = vpop.permute.xlu0 %473
        %v476 = vmul.f32 %v438, %v459
        %v477 = vmul.f32 %v443, %v464
        %v478 = vmul.f32 %v448, %v469
        %v479 = vmul.f32 %v453, %v474
        %481 = vset.pattern.permute.xlu0 0
        %482 = vperm.xlu0 %481, %v293
        %v483 = vpop.permute.xlu0 %482
        %486 = vset.pattern.permute.xlu0 0
        %487 = vperm.xlu0 %486, %v294
        %v488 = vpop.permute.xlu0 %487
        %491 = vset.pattern.permute.xlu0 0
        %492 = vperm.xlu0 %491, %v295
        %v493 = vpop.permute.xlu0 %492
        %496 = vset.pattern.permute.xlu0 0
        %497 = vperm.xlu0 %496, %v296
        %v498 = vpop.permute.xlu0 %497
        %v500 = vadd.f32 %v476, %v483
        %v501 = vadd.f32 %v477, %v488
        %v502 = vadd.f32 %v478, %v493
        %v503 = vadd.f32 %v479, %v498
        %v504 = vmax.f32 %v500, 0.0
        %v505 = vmax.f32 %v501, 0.0
        %v506 = vmax.f32 %v502, 0.0
        %v507 = vmax.f32 %v503, 0.0
        %512 = vrot.lane.b32.xlu0 %v504, 1
        %v513 = vpop.permute.xlu0 %512
        %514 = vrot.lane.b32.xlu0 %v505, 1
        %v515 = vpop.permute.xlu0 %514
        %516 = vrot.lane.b32.xlu0 %v506, 1
        %v517 = vpop.permute.xlu0 %516
        %518 = vrot.lane.b32.xlu0 %v507, 1
        %v519 = vpop.permute.xlu0 %518
        %vm524 = vcmask 7168
        %v525 = vsel %vm524, 0.0, %v513
        %v526 = vsel %vm524, 0.0, %v515
        %v527 = vsel %vm524, 0.0, %v517
        %v528 = vsel %vm524, 0.0, %v519
        %529 = vrot.lane.b32.xlu0 %v504, 127
        %v530 = vpop.permute.xlu0 %529
        %531 = vrot.lane.b32.xlu0 %v505, 127
        %v532 = vpop.permute.xlu0 %531
        %533 = vrot.lane.b32.xlu0 %v506, 127
        %v534 = vpop.permute.xlu0 %533
        %535 = vrot.lane.b32.xlu0 %v507, 127
        %v536 = vpop.permute.xlu0 %535
        %vm541 = vcmask 1039360
        %v542 = vsel %vm541, %v530, 0.0
        %v543 = vsel %vm541, %v532, 0.0
        %v544 = vsel %vm541, %v534, 0.0
        %v545 = vsel %vm541, %v536, 0.0
        %v547 = vsel %vm358, %v299, 0
        %549 = vmatprep.subr.mxu0 0.0
        %550 = vmatpush1.msra.mxu0 0.0
        %551 = vmatprep.subr.mxu0 0.0
        %552 = vmatpush1.msra.mxu0 0.0
        %553 = vmatprep.subr.mxu0 0.0
        %554 = vmatpush1.msra.mxu0 0.0
        %555 = vmatprep.subr.mxu0 0.0
        %556 = vmatpush1.msra.mxu0 0.0
        %557 = vmatprep.subr.mxu0 0.0
        %558 = vmatpush1.msra.mxu0 0.0
        %559 = vmatprep.subr.mxu0 0.0
        %560 = vmatpush1.msra.mxu0 0.0
        %561 = vmatprep.subr.mxu0 0.0
        %562 = vmatpush1.msra.mxu0 0.0
        %563 = vmatprep.subr.mxu0 0.0
        %564 = vmatpush1.msra.mxu0 0.0
        %565 = vmatprep.subr.mxu0 0.0
        %566 = vmatpush1.msra.mxu0 0.0
        %567 = vmatprep.subr.mxu0 0.0
        %568 = vmatpush1.msra.mxu0 0.0
        %569 = vmatprep.subr.mxu0 0.0
        %570 = vmatpush1.msra.mxu0 0.0
        %571 = vmatprep.subr.mxu0 0.0
        %572 = vmatpush1.msra.mxu0 0.0
        %573 = vmatprep.subr.mxu0 0.0
        %574 = vmatpush1.msra.mxu0 %v507
        %575 = vmatprep.subr.mxu0 0.0
        %576 = vmatpush1.msra.mxu0 %v506
        %577 = vmatprep.subr.mxu0 0.0
        %578 = vmatpush1.msra.mxu0 %v505
        %579 = vmatprep.subr.mxu0 0.0
        %580 = vmatpush1.msra.mxu0 %v504
        %581 = vmatprep.subr.mxu0 0.0
        %582 = vmatpush2.msra.mxu0 0.0
        %583 = vmatprep.subr.mxu0 0.0
        %584 = vmatpush2.msra.mxu0 0.0
        %585 = vmatprep.subr.mxu0 0.0
        %586 = vmatpush2.msra.mxu0 0.0
        %587 = vmatprep.subr.mxu0 0.0
        %588 = vmatpush2.msra.mxu0 0.0
        %589 = vmatprep.subr.mxu0 0.0
        %590 = vmatpush2.msra.mxu0 0.0
        %591 = vmatprep.subr.mxu0 0.0
        %592 = vmatpush2.msra.mxu0 0.0
        %593 = vmatprep.subr.mxu0 0.0
        %594 = vmatpush2.msra.mxu0 0.0
        %595 = vmatprep.subr.mxu0 0.0
        %596 = vmatpush2.msra.mxu0 0.0
        %597 = vmatprep.subr.mxu0 0.0
        %598 = vmatpush2.msra.mxu0 0.0
        %599 = vmatprep.subr.mxu0 0.0
        %600 = vmatpush2.msra.mxu0 0.0
        %601 = vmatprep.subr.mxu0 0.0
        %602 = vmatpush2.msra.mxu0 0.0
        %603 = vmatprep.subr.mxu0 0.0
        %604 = vmatpush2.msra.mxu0 0.0
        %605 = vmatprep.subr.mxu0 0.0
        %606 = vmatpush2.msra.mxu0 0.0
        %607 = vmatprep.subr.mxu0 0.0
        %608 = vmatpush2.msra.mxu0 0.0
        %609 = vmatprep.subr.mxu0 0.0
        %610 = vmatpush2.msra.mxu0 0.0
        %611 = vmatprep.subr.mxu0 0.0
        %612 = vmatpush2.msra.mxu0 0.0
        %613 = vmatprep.mubr.f32.mxu0 0.0
        %614 = vmatmul.mubr.f32.gmra.mxu0 %v547
        %v615 = vpop.f32.mrf.mxu0
        %v616 = vadd.f32 0.0, %v615
        %v617 = vpop.f32.mrf.mxu0
        %618 = vdwg.mxu0
        %v620 = vsel %vm358, %v297, 0
        %622 = vmatprep.subr.mxu0 0.0
        %623 = vmatpush1.msra.mxu0 0.0
        %624 = vmatprep.subr.mxu0 0.0
        %625 = vmatpush1.msra.mxu0 0.0
        %626 = vmatprep.subr.mxu0 0.0
        %627 = vmatpush1.msra.mxu0 0.0
        %628 = vmatprep.subr.mxu0 0.0
        %629 = vmatpush1.msra.mxu0 0.0
        %630 = vmatprep.subr.mxu0 0.0
        %631 = vmatpush1.msra.mxu0 0.0
        %632 = vmatprep.subr.mxu0 0.0
        %633 = vmatpush1.msra.mxu0 0.0
        %634 = vmatprep.subr.mxu0 0.0
        %635 = vmatpush1.msra.mxu0 0.0
        %636 = vmatprep.subr.mxu0 0.0
        %637 = vmatpush1.msra.mxu0 0.0
        %638 = vmatprep.subr.mxu0 0.0
        %639 = vmatpush1.msra.mxu0 0.0
        %640 = vmatprep.subr.mxu0 0.0
        %641 = vmatpush1.msra.mxu0 0.0
        %642 = vmatprep.subr.mxu0 0.0
        %643 = vmatpush1.msra.mxu0 0.0
        %644 = vmatprep.subr.mxu0 0.0
        %645 = vmatpush1.msra.mxu0 0.0
        %646 = vmatprep.subr.mxu0 0.0
        %647 = vmatpush1.msra.mxu0 %v528
        %648 = vmatprep.subr.mxu0 0.0
        %649 = vmatpush1.msra.mxu0 %v527
        %650 = vmatprep.subr.mxu0 0.0
        %651 = vmatpush1.msra.mxu0 %v526
        %652 = vmatprep.subr.mxu0 0.0
        %653 = vmatpush1.msra.mxu0 %v525
        %654 = vmatprep.subr.mxu0 0.0
        %655 = vmatpush2.msra.mxu0 0.0
        %656 = vmatprep.subr.mxu0 0.0
        %657 = vmatpush2.msra.mxu0 0.0
        %658 = vmatprep.subr.mxu0 0.0
        %659 = vmatpush2.msra.mxu0 0.0
        %660 = vmatprep.subr.mxu0 0.0
        %661 = vmatpush2.msra.mxu0 0.0
        %662 = vmatprep.subr.mxu0 0.0
        %663 = vmatpush2.msra.mxu0 0.0
        %664 = vmatprep.subr.mxu0 0.0
        %665 = vmatpush2.msra.mxu0 0.0
        %666 = vmatprep.subr.mxu0 0.0
        %667 = vmatpush2.msra.mxu0 0.0
        %668 = vmatprep.subr.mxu0 0.0
        %669 = vmatpush2.msra.mxu0 0.0
        %670 = vmatprep.subr.mxu0 0.0
        %671 = vmatpush2.msra.mxu0 0.0
        %672 = vmatprep.subr.mxu0 0.0
        %673 = vmatpush2.msra.mxu0 0.0
        %674 = vmatprep.subr.mxu0 0.0
        %675 = vmatpush2.msra.mxu0 0.0
        %676 = vmatprep.subr.mxu0 0.0
        %677 = vmatpush2.msra.mxu0 0.0
        %678 = vmatprep.subr.mxu0 0.0
        %679 = vmatpush2.msra.mxu0 0.0
        %680 = vmatprep.subr.mxu0 0.0
        %681 = vmatpush2.msra.mxu0 0.0
        %682 = vmatprep.subr.mxu0 0.0
        %683 = vmatpush2.msra.mxu0 0.0
        %684 = vmatprep.subr.mxu0 0.0
        %685 = vmatpush2.msra.mxu0 0.0
        %686 = vmatprep.mubr.f32.mxu0 0.0
        %687 = vmatmul.mubr.f32.gmra.mxu0 %v620
        %v688 = vpop.f32.mrf.mxu0
        %v689 = vadd.f32 %v616, %v688
        %v690 = vpop.f32.mrf.mxu0
        %691 = vdwg.mxu0
        %v693 = vsel %vm358, %v301, 0
        %695 = vmatprep.subr.mxu0 0.0
        %696 = vmatpush1.msra.mxu0 0.0
        %697 = vmatprep.subr.mxu0 0.0
        %698 = vmatpush1.msra.mxu0 0.0
        %699 = vmatprep.subr.mxu0 0.0
        %700 = vmatpush1.msra.mxu0 0.0
        %701 = vmatprep.subr.mxu0 0.0
        %702 = vmatpush1.msra.mxu0 0.0
        %703 = vmatprep.subr.mxu0 0.0
        %704 = vmatpush1.msra.mxu0 0.0
        %705 = vmatprep.subr.mxu0 0.0
        %706 = vmatpush1.msra.mxu0 0.0
        %707 = vmatprep.subr.mxu0 0.0
        %708 = vmatpush1.msra.mxu0 0.0
        %709 = vmatprep.subr.mxu0 0.0
        %710 = vmatpush1.msra.mxu0 0.0
        %711 = vmatprep.subr.mxu0 0.0
        %712 = vmatpush1.msra.mxu0 0.0
        %713 = vmatprep.subr.mxu0 0.0
        %714 = vmatpush1.msra.mxu0 0.0
        %715 = vmatprep.subr.mxu0 0.0
        %716 = vmatpush1.msra.mxu0 0.0
        %717 = vmatprep.subr.mxu0 0.0
        %718 = vmatpush1.msra.mxu0 0.0
        %719 = vmatprep.subr.mxu0 0.0
        %720 = vmatpush1.msra.mxu0 %v545
        %721 = vmatprep.subr.mxu0 0.0
        %722 = vmatpush1.msra.mxu0 %v544
        %723 = vmatprep.subr.mxu0 0.0
        %724 = vmatpush1.msra.mxu0 %v543
        %725 = vmatprep.subr.mxu0 0.0
        %726 = vmatpush1.msra.mxu0 %v542
        %727 = vmatprep.subr.mxu0 0.0
        %728 = vmatpush2.msra.mxu0 0.0
        %729 = vmatprep.subr.mxu0 0.0
        %730 = vmatpush2.msra.mxu0 0.0
        %731 = vmatprep.subr.mxu0 0.0
        %732 = vmatpush2.msra.mxu0 0.0
        %733 = vmatprep.subr.mxu0 0.0
        %734 = vmatpush2.msra.mxu0 0.0
        %735 = vmatprep.subr.mxu0 0.0
        %736 = vmatpush2.msra.mxu0 0.0
        %737 = vmatprep.subr.mxu0 0.0
        %738 = vmatpush2.msra.mxu0 0.0
        %739 = vmatprep.subr.mxu0 0.0
        %740 = vmatpush2.msra.mxu0 0.0
        %741 = vmatprep.subr.mxu0 0.0
        %742 = vmatpush2.msra.mxu0 0.0
        %743 = vmatprep.subr.mxu0 0.0
        %744 = vmatpush2.msra.mxu0 0.0
        %745 = vmatprep.subr.mxu0 0.0
        %746 = vmatpush2.msra.mxu0 0.0
        %747 = vmatprep.subr.mxu0 0.0
        %748 = vmatpush2.msra.mxu0 0.0
        %749 = vmatprep.subr.mxu0 0.0
        %750 = vmatpush2.msra.mxu0 0.0
        %751 = vmatprep.subr.mxu0 0.0
        %752 = vmatpush2.msra.mxu0 0.0
        %753 = vmatprep.subr.mxu0 0.0
        %754 = vmatpush2.msra.mxu0 0.0
        %755 = vmatprep.subr.mxu0 0.0
        %756 = vmatpush2.msra.mxu0 0.0
        %757 = vmatprep.subr.mxu0 0.0
        %758 = vmatpush2.msra.mxu0 0.0
        %759 = vmatprep.mubr.f32.mxu0 0.0
        %760 = vmatmul.mubr.f32.gmra.mxu0 %v693
        %v761 = vpop.f32.mrf.mxu0
        %v762 = vadd.f32 0.0, %v761
        %v763 = vpop.f32.mrf.mxu0
        %764 = vdwg.mxu0
        %v765 = vadd.f32 %v689, %v762
        %766 = vst [vmem:[%s271] sm:$0xff] %v765
        %767 = vst [vmem:[%s271 + $0x8] sm:$0xff] %v302
        %768 = vst [vmem:[%s271 + $0x10] sm:$0xff] %v303
        %769 = vst [vmem:[%s271 + $0x18] sm:$0xff] %v304
        %770 = vst [vmem:[%s271 + $0x20] sm:$0xff] %v305
        %s771 = sand.u32 %s181, 1
        %s772 = scalar_lea.sflag [#allocation3], %s771
        %s773 = sand.u32 %s181, 1
        %s774 = smul.addr %s773, 40
        %s775 = scalar_lea.vmem [#allocation2], %s774
        // Predicated region
        $region49: #{tpu_custom_call.1} parent=47 // pred_check
          %p776 = pneg %p191
        $region50: #{tpu_custom_call.1} parent=47 // pred_check_branch
          %778 = sbr.rel (%p776) target = $region52
        $region51: #{tpu_custom_call.1} parent=47 // pred_region
          %s780 = ssub.s32 640, 640
          %781 = vsyncadd %s772, %s780
          %s782 = smul.addr %s21, 5
          %s783 = smul.addr %s782, 128
          %s784 = scalar_lea.hbm %s7, %s783
          %s785 = sshll.u32 %s775, 4
          %s786 = int_to_ptr.vmem [resolvable:$true] %s785
          %791 = dma.vmem_to_hbm [thread:$0]  %s786, 640, %s784, %s772, 128, 128, 8
        $region52: #{tpu_custom_call.1} parent=47 // pred_fallthru
          _
      $region48: #{tpu_custom_call.1} parent=5 // pred_fallthru
        _
      %p792 = scmp.le.s32.totalorder 2, %s16
      // Predicated region
      $region53: #{tpu_custom_call.1} parent=5 // pred_check
        %p793 = pneg %p792
      $region54: #{tpu_custom_call.1} parent=5 // pred_check_branch
        %795 = sbr.rel (%p793) target = $region56
      $region55: #{tpu_custom_call.1} parent=5 // pred_region
        %s796 = ssub.s32 %s16, 2
        // Predicated region
        $region57: #{tpu_custom_call.1} parent=55 // pred_check
          %p797 = pneg %p197
        $region58: #{tpu_custom_call.1} parent=55 // pred_check_branch
          %799 = sbr.rel (%p797) target = $region60
        $region59: #{tpu_custom_call.1} parent=55 // pred_region
          %s800 = sand.u32 %s182, 1
          %s801 = scalar_lea.sflag [#allocation3], %s800
          %s802 = sand.u32 %s182, 1
          %s803 = smul.addr %s802, 40
          %s804 = scalar_lea.vmem [#allocation2], %s803
          %805 = dma.done %s801, 640
        $region60: #{tpu_custom_call.1} parent=55 // pred_fallthru
          _
      $region56: #{tpu_custom_call.1} parent=5 // pred_fallthru
        _
    $region6: #{tpu_custom_call.1} parent=1 // loop_footer
      %s20 = sadd.s32 1, %s16
    $region7: #{tpu_custom_call.1} parent=1 // loop_footer_branch
      %15 = sbr.rel target = $region3
    $region8: #{tpu_custom_call.1} parent=1 // loop_exit
      _
    %806 = vsyncpa [#allocation3], 1
    %s807 = scalar_lea.sflag [#allocation3], 1
    %808 = vsyncpa %s807, 1

</llo_original>
